<compile_context>
chip_gen: v7x
topology: tpu7x:2x2x1
jax: 0.10.0
libtpu: 0.0.40
codegen_flags: <defaults>
</compile_context>

<pallas_src>
import jax
import jax.numpy as jnp
from jax.experimental import pallas as pl
from jax.experimental.pallas import tpu as pltpu


def sft_kernel(x_ref, w0_ref, b0_ref, ws1_ref, bs1_ref, wt1_ref, bt1_ref, out_ref):
    # x_ref block: (TB, C, T).  Spatial T is the lane (last) axis -> lane-dense.
    w0 = w0_ref[...]       # (4C, C)  compute dtype
    b0 = b0_ref[...]       # (4C, 1)  f32
    ws1 = ws1_ref[...]     # (C, 2C)  compute dtype
    bs1 = bs1_ref[...]     # (C, 1)   f32
    wt1 = wt1_ref[...]     # (C, 2C)  compute dtype
    bt1 = bt1_ref[...]     # (C, 1)   f32
    c2 = ws1.shape[1]      # 2C

    tb = x_ref.shape[0]
    for b in range(tb):    # TB is small & static -> unrolled
        x = x_ref[b]                                                    # (C, T)
        xc = x.astype(w0.dtype)

        # Fused first-layer 1x1 convs: [scale-branch ; shift-branch] on C_out.
        h = jnp.dot(w0, xc, preferred_element_type=jnp.float32) + b0   # (4C, T)
        h = jnp.maximum(h, 0.1 * h)                                    # leaky_relu(0.1)
        hc = h.astype(ws1.dtype)

        # Second-layer 1x1 convs: two real matmuls (no zero-padded block diag).
        scale = jnp.dot(ws1, hc[:c2], preferred_element_type=jnp.float32) + bs1
        shift = jnp.dot(wt1, hc[c2:], preferred_element_type=jnp.float32) + bt1

        out_ref[b] = (x.astype(jnp.float32) * scale + shift).astype(out_ref.dtype)


def _pick_spatial_tile(S, max_tile_s):
    """Lane tile: exact divisor of S (multiple of 128), full extent, or ragged."""
    max_tile_s = max(128, (max_tile_s // 128) * 128)
    if S <= max_tile_s:
        return S                           # full-extent last dim: always legal
    for t in range(max_tile_s, 127, -128):
        if S % t == 0:
            return t                       # exact divisor: no masked stores
    return max_tile_s                      # ragged last tile; Pallas masks it


def _pick_batch_block(N, bytes_per_batch, target_bytes, max_tb=8):
    """Smallest divisor of N (capped) so each grid step moves >= target_bytes."""
    needed = min(max(1, -(-target_bytes // max(bytes_per_batch, 1))), N, max_tb)
    for tb in range(needed, min(N, max_tb) + 1):
        if N % tb == 0:
            return tb
    best = 1
    for tb in range(1, min(N, max_tb) + 1):
        if N % tb == 0:
            best = tb
    return best


def sft_forward(x_nchw, params, *, compute_dtype=None, max_tile_s=4096,
                target_step_bytes=2 * 1024 * 1024):
    """x_nchw: (N, C, H, W). params: PyTorch layout, weights (C_out, C_in), biases (C_out,).

    compute_dtype: dtype of the MXU operands (pass jnp.bfloat16 on v6e/v7x to
    halve weight HBM traffic and VMEM intermediates); accumulation stays f32.
    """
    N, C, H, W = x_nchw.shape
    S = H * W
    x_dtype = x_nchw.dtype

    ws0, bs0 = params["ws0"], params["bs0"]    # (2C, C), (2C,)
    wt0, bt0 = params["wt0"], params["bt0"]    # (2C, C), (2C,)
    ws1, bs1 = params["ws1"], params["bs1"]    # (C, 2C), (C,)
    wt1, bt1 = params["wt1"], params["bt1"]    # (C, 2C), (C,)

    cd = jnp.dtype(compute_dtype) if compute_dtype is not None else jnp.dtype(ws0.dtype)

    # Fused first-layer weight/bias (all MACs useful).  Biases stay f32.
    w0 = jnp.concatenate([ws0, wt0], axis=0).astype(cd)                       # (4C, C)
    b0 = jnp.concatenate([bs0, bt0], axis=0)[:, None].astype(jnp.float32)     # (4C, 1)
    ws1c = ws1.astype(cd)
    wt1c = wt1.astype(cd)
    bs1c = bs1[:, None].astype(jnp.float32)
    bt1c = bt1[:, None].astype(jnp.float32)

    # Free reshape: spatial (H*W) becomes the lane axis, no wrapper transpose.
    x3 = x_nchw.reshape(N, C, S)

    itemsize = jnp.dtype(x_dtype).itemsize
    tile_s = _pick_spatial_tile(S, max_tile_s)
    tb = _pick_batch_block(N, C * tile_s * itemsize, target_step_bytes)
    grid = (N // tb, pl.cdiv(S, tile_s))

    def const_spec(arr):
        nd = arr.ndim
        return pl.BlockSpec(arr.shape, lambda n, s, _nd=nd: (0,) * _nd)

    flops = int(N) * int(S) * (16 * int(C) * int(C))          # 3 real matmuls / pixel
    bytes_accessed = int(
        2 * N * C * S * itemsize
        + (w0.size + ws1c.size + wt1c.size) * cd.itemsize
        + (b0.size + bs1c.size + bt1c.size) * 4)

    out3 = pl.pallas_call(
        sft_kernel,
        out_shape=jax.ShapeDtypeStruct((N, C, S), x_dtype),
        grid_spec=pltpu.PrefetchScalarGridSpec(
            num_scalar_prefetch=0,
            grid=grid,
            in_specs=[
                pl.BlockSpec((tb, C, tile_s), lambda n, s: (n, 0, s)),   # x tile
                const_spec(w0), const_spec(b0),                          # fused conv0
                const_spec(ws1c), const_spec(bs1c),                      # scale conv1
                const_spec(wt1c), const_spec(bt1c),                      # shift conv1
            ],
            out_specs=pl.BlockSpec((tb, C, tile_s), lambda n, s: (n, 0, s)),
        ),
        compiler_params=pltpu.CompilerParams(
            # TODO(synk): on v7x, verify 2-TensorCore sharding in the profile;
            # if single-TC, mark the batch axis pltpu.CORE_PARALLEL.
            dimension_semantics=("parallel", "parallel"),
            vmem_limit_bytes=48 * 1024 * 1024,
        ),
        cost_estimate=pl.CostEstimate(
            flops=flops, transcendentals=0, bytes_accessed=bytes_accessed),
    )(x3, w0, b0, ws1c, bs1c, wt1c, bt1c)

    return out3.reshape(N, C, H, W)


def init_sft_params(key, dim, dtype=jnp.float32):
    """Deterministic synthetic init.  PyTorch Conv2d layout: weight (C_out, C_in), bias (C_out,)."""
    ks = jax.random.split(key, 8)

    def w(k, cout, cin):
        bound = 1.0 / (cin ** 0.5)
        return jax.random.uniform(k, (cout, cin), dtype, -bound, bound)

    def b(k, cout, cin):
        bound = 1.0 / (cin ** 0.5)
        return jax.random.uniform(k, (cout,), dtype, -bound, bound)

    d2 = dim * 2
    return {
        "ws0": w(ks[0], d2, dim), "bs0": b(ks[1], d2, dim),
        "ws1": w(ks[2], dim, d2), "bs1": b(ks[3], dim, d2),
        "wt0": w(ks[4], d2, dim), "bt0": b(ks[5], d2, dim),
        "wt1": w(ks[6], dim, d2), "bt1": b(ks[7], dim, d2),
    }


def sft_reference(x_nchw, params):
    """Pure-JAX reference of the PyTorch forward (for sanity check)."""
    def conv1x1(x, w, b):
        return jnp.einsum("oi,nihw->nohw", w, x) + b[None, :, None, None]

    def lrelu(x):
        return jnp.where(x >= 0, x, 0.1 * x)

    h_s = lrelu(conv1x1(x_nchw, params["ws0"], params["bs0"]))
    scale = conv1x1(h_s, params["ws1"], params["bs1"])
    h_t = lrelu(conv1x1(x_nchw, params["wt0"], params["bt0"]))
    shift = conv1x1(h_t, params["wt1"], params["bt1"])
    return x_nchw * scale + shift


if __name__ == "__main__":
    key = jax.random.PRNGKey(0)
    k_x, k_p = jax.random.split(key)

    N, C, H, W = 2, 4, 16, 16
    x = jax.random.normal(k_x, (N, C, H, W), jnp.float32)
    params = init_sft_params(k_p, C)

    ref = jax.block_until_ready(sft_reference(x, params))

    # Full-precision path (exact semantics of the PyTorch module).
    out = jax.block_until_ready(sft_forward(x, params))
    assert out.shape == (N, C, H, W)
    assert jnp.allclose(out, ref, atol=1e-5, rtol=1e-5)

    # bf16 MXU-operand path (perf option for v6e/v7x), f32 accumulation.
    out_bf16 = jax.block_until_ready(sft_forward(x, params, compute_dtype=jnp.bfloat16))
    assert out_bf16.shape == (N, C, H, W)
    assert jnp.allclose(out_bf16, ref, atol=1e-1, rtol=1e-1)

    print("KERNEL_OK")
</pallas_src>

<mosaic_0001>
module attributes {stable_mosaic.version = 11 : i64} {
  func.func @sft_kernel(%arg0: i32, %arg1: i32, %arg2: memref<2x4x256xf32, #tpu.memory_space<vmem>>, %arg3: memref<16x4xf32, #tpu.memory_space<vmem>>, %arg4: memref<16x1xf32, #tpu.memory_space<vmem>>, %arg5: memref<4x8xf32, #tpu.memory_space<vmem>>, %arg6: memref<4x1xf32, #tpu.memory_space<vmem>>, %arg7: memref<4x8xf32, #tpu.memory_space<vmem>>, %arg8: memref<4x1xf32, #tpu.memory_space<vmem>>, %arg9: memref<2x4x256xf32, #tpu.memory_space<vmem>>) attributes {dimension_semantics = [#tpu.dimension_semantics<parallel>, #tpu.dimension_semantics<parallel>], iteration_bounds = array<i64: 1, 1>, scalar_prefetch = 0 : i64, scratch_operands = 0 : i64, tpu.core_type = #tpu.core_type<tc>, window_params = [{transform_indices = @transform_0, window_bounds = array<i64: 2, 4, 256>}, {pipeline_mode = #tpu.pipeline_mode<synchronous>, transform_indices = @transform_1, window_bounds = array<i64: 16, 4>}, {pipeline_mode = #tpu.pipeline_mode<synchronous>, transform_indices = @transform_2, window_bounds = array<i64: 16, 1>}, {pipeline_mode = #tpu.pipeline_mode<synchronous>, transform_indices = @transform_3, window_bounds = array<i64: 4, 8>}, {pipeline_mode = #tpu.pipeline_mode<synchronous>, transform_indices = @transform_4, window_bounds = array<i64: 4, 1>}, {pipeline_mode = #tpu.pipeline_mode<synchronous>, transform_indices = @transform_5, window_bounds = array<i64: 4, 8>}, {pipeline_mode = #tpu.pipeline_mode<synchronous>, transform_indices = @transform_6, window_bounds = array<i64: 4, 1>}, {transform_indices = @transform_7, window_bounds = array<i64: 2, 4, 256>}]} {
    %c0 = arith.constant 0 : index
    %c0_0 = arith.constant 0 : index
    %0 = vector.load %arg3[%c0, %c0_0] : memref<16x4xf32, #tpu.memory_space<vmem>>, vector<16x4xf32>
    %c0_1 = arith.constant 0 : index
    %c0_2 = arith.constant 0 : index
    %1 = vector.load %arg4[%c0_1, %c0_2] : memref<16x1xf32, #tpu.memory_space<vmem>>, vector<16x1xf32>
    %c0_3 = arith.constant 0 : index
    %c0_4 = arith.constant 0 : index
    %2 = vector.load %arg5[%c0_3, %c0_4] : memref<4x8xf32, #tpu.memory_space<vmem>>, vector<4x8xf32>
    %c0_5 = arith.constant 0 : index
    %c0_6 = arith.constant 0 : index
    %3 = vector.load %arg6[%c0_5, %c0_6] : memref<4x1xf32, #tpu.memory_space<vmem>>, vector<4x1xf32>
    %c0_7 = arith.constant 0 : index
    %c0_8 = arith.constant 0 : index
    %4 = vector.load %arg7[%c0_7, %c0_8] : memref<4x8xf32, #tpu.memory_space<vmem>>, vector<4x8xf32>
    %c0_9 = arith.constant 0 : index
    %c0_10 = arith.constant 0 : index
    %5 = vector.load %arg8[%c0_9, %c0_10] : memref<4x1xf32, #tpu.memory_space<vmem>>, vector<4x1xf32>
    %c0_11 = arith.constant 0 : index
    %c0_12 = arith.constant 0 : index
    %c0_13 = arith.constant 0 : index
    %6 = vector.load %arg2[%c0_11, %c0_12, %c0_13] : memref<2x4x256xf32, #tpu.memory_space<vmem>>, vector<1x4x256xf32>
    %7 = vector.shape_cast %6 : vector<1x4x256xf32> to vector<4x256xf32>
    %cst = arith.constant dense<0.000000e+00> : vector<16x256xf32>
    %8 = tpu.matmul %0, %7, %cst {dimension_numbers = #tpu.dot_dimension_numbers<[1], [0], [0], [1], [0, 0, 1, 1], [], []>} : vector<16x4xf32>, vector<4x256xf32>, vector<16x256xf32> -> vector<16x256xf32>
    %9 = vector.broadcast %1 : vector<16x1xf32> to vector<16x256xf32>
    %10 = arith.addf %8, %9 : vector<16x256xf32>
    %cst_14 = arith.constant 1.000000e-01 : f32
    %11 = vector.broadcast %cst_14 : f32 to vector<16x256xf32>
    %12 = arith.mulf %11, %10 : vector<16x256xf32>
    %13 = arith.maximumf %10, %12 : vector<16x256xf32>
    %14 = vector.extract_strided_slice %13 {offsets = [0, 0], sizes = [8, 256], strides = [1, 1]} : vector<16x256xf32> to vector<8x256xf32>
    %cst_15 = arith.constant dense<0.000000e+00> : vector<4x256xf32>
    %15 = tpu.matmul %2, %14, %cst_15 {dimension_numbers = #tpu.dot_dimension_numbers<[1], [0], [0], [1], [0, 0, 1, 1], [], []>} : vector<4x8xf32>, vector<8x256xf32>, vector<4x256xf32> -> vector<4x256xf32>
    %16 = vector.broadcast %3 : vector<4x1xf32> to vector<4x256xf32>
    %17 = arith.addf %15, %16 : vector<4x256xf32>
    %18 = vector.extract_strided_slice %13 {offsets = [8, 0], sizes = [8, 256], strides = [1, 1]} : vector<16x256xf32> to vector<8x256xf32>
    %cst_16 = arith.constant dense<0.000000e+00> : vector<4x256xf32>
    %19 = tpu.matmul %4, %18, %cst_16 {dimension_numbers = #tpu.dot_dimension_numbers<[1], [0], [0], [1], [0, 0, 1, 1], [], []>} : vector<4x8xf32>, vector<8x256xf32>, vector<4x256xf32> -> vector<4x256xf32>
    %20 = vector.broadcast %5 : vector<4x1xf32> to vector<4x256xf32>
    %21 = arith.addf %19, %20 : vector<4x256xf32>
    %22 = arith.mulf %7, %17 : vector<4x256xf32>
    %23 = arith.addf %22, %21 : vector<4x256xf32>
    %c0_17 = arith.constant 0 : index
    %c0_18 = arith.constant 0 : index
    %c0_19 = arith.constant 0 : index
    %24 = vector.load %arg9[%c0_17, %c0_18, %c0_19] : memref<2x4x256xf32, #tpu.memory_space<vmem>>, vector<1x4x256xf32>
    %25 = vector.shape_cast %24 : vector<1x4x256xf32> to vector<4x256xf32>
    %26 = vector.shape_cast %23 : vector<4x256xf32> to vector<1x4x256xf32>
    tpu.vector_store %arg9[%c0_17, %c0_18, %c0_19], %26 {strides = array<i32>} : memref<2x4x256xf32, #tpu.memory_space<vmem>>, vector<1x4x256xf32>,
    %c1 = arith.constant 1 : index
    %c0_20 = arith.constant 0 : index
    %c0_21 = arith.constant 0 : index
    %27 = vector.load %arg2[%c1, %c0_20, %c0_21] : memref<2x4x256xf32, #tpu.memory_space<vmem>>, vector<1x4x256xf32>
    %28 = vector.shape_cast %27 : vector<1x4x256xf32> to vector<4x256xf32>
    %cst_22 = arith.constant dense<0.000000e+00> : vector<16x256xf32>
    %29 = tpu.matmul %0, %28, %cst_22 {dimension_numbers = #tpu.dot_dimension_numbers<[1], [0], [0], [1], [0, 0, 1, 1], [], []>} : vector<16x4xf32>, vector<4x256xf32>, vector<16x256xf32> -> vector<16x256xf32>
    %30 = vector.broadcast %1 : vector<16x1xf32> to vector<16x256xf32>
    %31 = arith.addf %29, %30 : vector<16x256xf32>
    %cst_23 = arith.constant 1.000000e-01 : f32
    %32 = vector.broadcast %cst_23 : f32 to vector<16x256xf32>
    %33 = arith.mulf %32, %31 : vector<16x256xf32>
    %34 = arith.maximumf %31, %33 : vector<16x256xf32>
    %35 = vector.extract_strided_slice %34 {offsets = [0, 0], sizes = [8, 256], strides = [1, 1]} : vector<16x256xf32> to vector<8x256xf32>
    %cst_24 = arith.constant dense<0.000000e+00> : vector<4x256xf32>
    %36 = tpu.matmul %2, %35, %cst_24 {dimension_numbers = #tpu.dot_dimension_numbers<[1], [0], [0], [1], [0, 0, 1, 1], [], []>} : vector<4x8xf32>, vector<8x256xf32>, vector<4x256xf32> -> vector<4x256xf32>
    %37 = vector.broadcast %3 : vector<4x1xf32> to vector<4x256xf32>
    %38 = arith.addf %36, %37 : vector<4x256xf32>
    %39 = vector.extract_strided_slice %34 {offsets = [8, 0], sizes = [8, 256], strides = [1, 1]} : vector<16x256xf32> to vector<8x256xf32>
    %cst_25 = arith.constant dense<0.000000e+00> : vector<4x256xf32>
    %40 = tpu.matmul %4, %39, %cst_25 {dimension_numbers = #tpu.dot_dimension_numbers<[1], [0], [0], [1], [0, 0, 1, 1], [], []>} : vector<4x8xf32>, vector<8x256xf32>, vector<4x256xf32> -> vector<4x256xf32>
    %41 = vector.broadcast %5 : vector<4x1xf32> to vector<4x256xf32>
    %42 = arith.addf %40, %41 : vector<4x256xf32>
    %43 = arith.mulf %28, %38 : vector<4x256xf32>
    %44 = arith.addf %43, %42 : vector<4x256xf32>
    %c1_26 = arith.constant 1 : index
    %c0_27 = arith.constant 0 : index
    %c0_28 = arith.constant 0 : index
    %45 = vector.load %arg9[%c1_26, %c0_27, %c0_28] : memref<2x4x256xf32, #tpu.memory_space<vmem>>, vector<1x4x256xf32>
    %46 = vector.shape_cast %45 : vector<1x4x256xf32> to vector<4x256xf32>
    %47 = vector.shape_cast %44 : vector<4x256xf32> to vector<1x4x256xf32>
    tpu.vector_store %arg9[%c1_26, %c0_27, %c0_28], %47 {strides = array<i32>} : memref<2x4x256xf32, #tpu.memory_space<vmem>>, vector<1x4x256xf32>,
    return
  }
  func.func @transform_0(%arg0: i32, %arg1: i32) -> (i32, i32, i32) {
    %c0_i32 = arith.constant 0 : i32
    %c0_i32_0 = arith.constant 0 : i32
    return %arg0, %c0_i32, %arg1 : i32, i32, i32
  }
  func.func @transform_1(%arg0: i32, %arg1: i32) -> (i32, i32) {
    %c0_i32 = arith.constant 0 : i32
    %c0_i32_0 = arith.constant 0 : i32
    %c0_i32_1 = arith.constant 0 : i32
    return %c0_i32, %c0_i32_0 : i32, i32
  }
  func.func @transform_2(%arg0: i32, %arg1: i32) -> (i32, i32) {
    %c0_i32 = arith.constant 0 : i32
    %c0_i32_0 = arith.constant 0 : i32
    %c0_i32_1 = arith.constant 0 : i32
    return %c0_i32, %c0_i32_0 : i32, i32
  }
  func.func @transform_3(%arg0: i32, %arg1: i32) -> (i32, i32) {
    %c0_i32 = arith.constant 0 : i32
    %c0_i32_0 = arith.constant 0 : i32
    %c0_i32_1 = arith.constant 0 : i32
    return %c0_i32, %c0_i32_0 : i32, i32
  }
  func.func @transform_4(%arg0: i32, %arg1: i32) -> (i32, i32) {
    %c0_i32 = arith.constant 0 : i32
    %c0_i32_0 = arith.constant 0 : i32
    %c0_i32_1 = arith.constant 0 : i32
    return %c0_i32, %c0_i32_0 : i32, i32
  }
  func.func @transform_5(%arg0: i32, %arg1: i32) -> (i32, i32) {
    %c0_i32 = arith.constant 0 : i32
    %c0_i32_0 = arith.constant 0 : i32
    %c0_i32_1 = arith.constant 0 : i32
    return %c0_i32, %c0_i32_0 : i32, i32
  }
  func.func @transform_6(%arg0: i32, %arg1: i32) -> (i32, i32) {
    %c0_i32 = arith.constant 0 : i32
    %c0_i32_0 = arith.constant 0 : i32
    %c0_i32_1 = arith.constant 0 : i32
    return %c0_i32, %c0_i32_0 : i32, i32
  }
  func.func @transform_7(%arg0: i32, %arg1: i32) -> (i32, i32, i32) {
    %c0_i32 = arith.constant 0 : i32
    %c0_i32_0 = arith.constant 0 : i32
    return %arg0, %c0_i32, %arg1 : i32, i32, i32
  }
}

</mosaic_0001>

<llo_original>
// kernel: tpu_custom_call.1
$region0: #{tpu_custom_call.1}
  #allocation0 [shape = 'u32[]', space=smem, size = 0x4, offset = 0x4, fixed_abs, tag = 'smem constant byte address 0x4 - core index']
  #allocation1 [shape = 'u32[144,128]{1,0:T(1,128)}', space=vmem, size = 0x12000, scoped, tag = 'internal scratch']
  %s0 = inlined_call_operand.vmem [shape: f32[2,4,256], index: 0, kind: input, shape index: {}]
  %s1 = inlined_call_operand.vmem [shape: f32[16,4], index: 1, kind: input, shape index: {}]
  %s2 = inlined_call_operand.vmem [shape: f32[16,1], index: 2, kind: input, shape index: {}]
  %s3 = inlined_call_operand.vmem [shape: f32[4,8], index: 3, kind: input, shape index: {}]
  %s4 = inlined_call_operand.vmem [shape: f32[4,1], index: 4, kind: input, shape index: {}]
  %s5 = inlined_call_operand.vmem [shape: f32[4,8], index: 5, kind: input, shape index: {}]
  %s6 = inlined_call_operand.vmem [shape: f32[4,1], index: 6, kind: input, shape index: {}]
  %s7 = inlined_call_operand.hbm [shape: f32[2,4,256], index: 7, kind: output, shape index: {}]
  %s8 = sld [smem:[#allocation0]]
  $region38: #{tpu_custom_call.1} parent=0
    _
  %s10 = ssub.s32 1, %s8
  %s11 = scalar_select 0, %s10, %s8
  $region1: #{tpu_custom_call.1} parent=0
    #allocation2 [shape = 'u8[8192]{0}', space=vmem, size = 0x2000, scoped, tag = 'output window, operand 0, single buffered']
    #allocation3 [shape = 's32[1]{0}', space=sflag, size = 0x4, scoped, tag = 'scoped memory for tpu_custom_call.1']
    %12 = vsyncpa [#allocation3], 0
    // Predicated region
    $region2: #{tpu_custom_call.1} parent=1 // pred_check
      _
    $region3: #{tpu_custom_call.1} parent=1 // pred_check_branch
      %14 = sbr.rel (0) target = $region5
    $region4: #{tpu_custom_call.1} parent=1 // pred_region
      _
    $region5: #{tpu_custom_call.1} parent=1 // pred_fallthru
      _
    // Predicated region
    $region6: #{tpu_custom_call.1} parent=1 // pred_check
      _
    $region7: #{tpu_custom_call.1} parent=1 // pred_check_branch
      %16 = sbr.rel (0) target = $region9
    $region8: #{tpu_custom_call.1} parent=1 // pred_region
      _
    $region9: #{tpu_custom_call.1} parent=1 // pred_fallthru
      _
    // Predicated region
    $region10: #{tpu_custom_call.1} parent=1 // pred_check
      _
    $region11: #{tpu_custom_call.1} parent=1 // pred_check_branch
      %18 = sbr.rel (0) target = $region13
    $region12: #{tpu_custom_call.1} parent=1 // pred_region
      _
    $region13: #{tpu_custom_call.1} parent=1 // pred_fallthru
      _
    // Predicated region
    $region14: #{tpu_custom_call.1} parent=1 // pred_check
      _
    $region15: #{tpu_custom_call.1} parent=1 // pred_check_branch
      %20 = sbr.rel (0) target = $region17
    $region16: #{tpu_custom_call.1} parent=1 // pred_region
      _
    $region17: #{tpu_custom_call.1} parent=1 // pred_fallthru
      _
    // Predicated region
    $region18: #{tpu_custom_call.1} parent=1 // pred_check
      _
    $region19: #{tpu_custom_call.1} parent=1 // pred_check_branch
      %22 = sbr.rel (0) target = $region21
    $region20: #{tpu_custom_call.1} parent=1 // pred_region
      _
    $region21: #{tpu_custom_call.1} parent=1 // pred_fallthru
      _
    // Predicated region
    $region22: #{tpu_custom_call.1} parent=1 // pred_check
      _
    $region23: #{tpu_custom_call.1} parent=1 // pred_check_branch
      %24 = sbr.rel (0) target = $region25
    $region24: #{tpu_custom_call.1} parent=1 // pred_region
      _
    $region25: #{tpu_custom_call.1} parent=1 // pred_fallthru
      _
    // Predicated region
    $region26: #{tpu_custom_call.1} parent=1 // pred_check
      _
    $region27: #{tpu_custom_call.1} parent=1 // pred_check_branch
      %26 = sbr.rel (0) target = $region29
    $region28: #{tpu_custom_call.1} parent=1 // pred_region
      _
    $region29: #{tpu_custom_call.1} parent=1 // pred_fallthru
      _
    %v27 = vld [vmem:[%s1] sm:$0xff]
    %v28 = vld [vmem:[%s1 + $0x8] sm:$0xff]
    %v29 = vld [vmem:[%s2] sm:$0xff]
    %v30 = vld [vmem:[%s2 + $0x8] sm:$0xff]
    %v31 = vld [vmem:[%s3] sm:$0xf]
    %v32 = vld [vmem:[%s4] sm:$0xf]
    %v33 = vld [vmem:[%s5] sm:$0xf]
    %v34 = vld [vmem:[%s6] sm:$0xf]
    %v35 = vld [vmem:[%s0] sm:$0xff]
    %37 = vset.pattern.permute.xlu0 0
    %38 = vperm.xlu0 %37, %v29
    %v39 = vpop.permute.xlu0 %38
    %42 = vset.pattern.permute.xlu0 0
    %43 = vperm.xlu0 %42, %v30
    %v44 = vpop.permute.xlu0 %43
    %v47 = vcombine.high %v35, %v35
    %vm48 = vcmask 31744
    %v50 = vsel %vm48, %v27, 0
    %v53 = vsel %vm48, %v28, 0
    %vm55 = vcmask 1043456
    %v56 = vsel %vm55, %v35, 0
    %v58 = vsel %vm55, %v47, 0
    %60 = vmatprep.subr.mxu0 %v58
    %61 = vmatpush1.msra.mxu0 %v56
    %62 = vmatprep.subr.mxu0 0.0
    %63 = vmatpush1.msra.mxu0 0.0
    %64 = vmatprep.subr.mxu0 0.0
    %65 = vmatpush1.msra.mxu0 0.0
    %66 = vmatprep.subr.mxu0 0.0
    %67 = vmatpush1.msra.mxu0 0.0
    %68 = vmatprep.subr.mxu0 0.0
    %69 = vmatpush1.msra.mxu0 0.0
    %70 = vmatprep.subr.mxu0 0.0
    %71 = vmatpush1.msra.mxu0 0.0
    %72 = vmatprep.subr.mxu0 0.0
    %73 = vmatpush1.msra.mxu0 0.0
    %74 = vmatprep.subr.mxu0 0.0
    %75 = vmatpush1.msra.mxu0 0.0
    %76 = vmatprep.subr.mxu0 0.0
    %77 = vmatpush1.msra.mxu0 0.0
    %78 = vmatprep.subr.mxu0 0.0
    %79 = vmatpush1.msra.mxu0 0.0
    %80 = vmatprep.subr.mxu0 0.0
    %81 = vmatpush1.msra.mxu0 0.0
    %82 = vmatprep.subr.mxu0 0.0
    %83 = vmatpush1.msra.mxu0 0.0
    %84 = vmatprep.subr.mxu0 0.0
    %85 = vmatpush1.msra.mxu0 0.0
    %86 = vmatprep.subr.mxu0 0.0
    %87 = vmatpush1.msra.mxu0 0.0
    %88 = vmatprep.subr.mxu0 0.0
    %89 = vmatpush1.msra.mxu0 0.0
    %90 = vmatprep.subr.mxu0 0.0
    %91 = vmatpush1.msra.mxu0 0.0
    %92 = vmatprep.subr.mxu0 0.0
    %93 = vmatpush1.msra.mxu0 0.0
    %94 = vmatprep.subr.mxu0 0.0
    %95 = vmatpush1.msra.mxu0 0.0
    %96 = vmatprep.subr.mxu0 0.0
    %97 = vmatpush1.msra.mxu0 0.0
    %98 = vmatprep.subr.mxu0 0.0
    %99 = vmatpush1.msra.mxu0 0.0
    %100 = vmatprep.subr.mxu0 0.0
    %101 = vmatpush1.msra.mxu0 0.0
    %102 = vmatprep.subr.mxu0 0.0
    %103 = vmatpush1.msra.mxu0 0.0
    %104 = vmatprep.subr.mxu0 0.0
    %105 = vmatpush1.msra.mxu0 0.0
    %106 = vmatprep.subr.mxu0 0.0
    %107 = vmatpush1.msra.mxu0 0.0
    %108 = vmatprep.subr.mxu0 0.0
    %109 = vmatpush1.msra.mxu0 0.0
    %110 = vmatprep.subr.mxu0 0.0
    %111 = vmatpush1.msra.mxu0 0.0
    %112 = vmatprep.subr.mxu0 0.0
    %113 = vmatpush1.msra.mxu0 0.0
    %114 = vmatprep.subr.mxu0 0.0
    %115 = vmatpush1.msra.mxu0 0.0
    %116 = vmatprep.subr.mxu0 0.0
    %117 = vmatpush1.msra.mxu0 0.0
    %118 = vmatprep.subr.mxu0 0.0
    %119 = vmatpush1.msra.mxu0 0.0
    %120 = vmatprep.subr.mxu0 0.0
    %121 = vmatpush1.msra.mxu0 0.0
    %122 = vmatprep.subr.mxu0 0.0
    %123 = vmatpush1.msra.mxu0 0.0
    %124 = vmatprep.mubr.f32.mxu0 0.0
    %125 = vmatmul.mubr.f32.gmra.mrb[0].mxu0 %v50
    %v126 = vpop.f32.mrb[0].mxu0
    %v127 = vadd.f32 %v39, %v126
    %v128 = vpop.f32.mrb[0].mxu0
    %v129 = vadd.f32 %v39, %v128
    %130 = vmatprep.mubr.f32.mxu0 0.0
    %131 = vmatmul.mubr.f32.gmra.mrb[0].mxu0 %v53
    %v132 = vpop.f32.mrb[0].mxu0
    %v133 = vadd.f32 %v44, %v132
    %v134 = vpop.f32.mrb[0].mxu0
    %v135 = vadd.f32 %v44, %v134
    %136 = vdwg.mxu0
    %v137 = vmul.f32 %v127, 0.1
    %v138 = vmul.f32 %v129, 0.1
    %v139 = vmul.f32 %v133, 0.1
    %v140 = vmul.f32 %v135, 0.1
    %v141 = vmax.f32 %v127, %v137
    %v142 = vmax.f32 %v129, %v138
    %v143 = vmax.f32 %v133, %v139
    %v144 = vmax.f32 %v135, %v140
    %146 = vset.pattern.permute.xlu0 0
    %147 = vperm.xlu0 %146, %v32
    %v148 = vpop.permute.xlu0 %147
    %vm150 = vcmask 64512
    %v152 = vsel %vm150, %v31, 0
    %154 = vmatprep.subr.mxu0 %v142
    %155 = vmatpush1.msra.mxu0 %v141
    %156 = vmatprep.subr.mxu0 0.0
    %157 = vmatpush1.msra.mxu0 0.0
    %158 = vmatprep.subr.mxu0 0.0
    %159 = vmatpush1.msra.mxu0 0.0
    %160 = vmatprep.subr.mxu0 0.0
    %161 = vmatpush1.msra.mxu0 0.0
    %162 = vmatprep.subr.mxu0 0.0
    %163 = vmatpush1.msra.mxu0 0.0
    %164 = vmatprep.subr.mxu0 0.0
    %165 = vmatpush1.msra.mxu0 0.0
    %166 = vmatprep.subr.mxu0 0.0
    %167 = vmatpush1.msra.mxu0 0.0
    %168 = vmatprep.subr.mxu0 0.0
    %169 = vmatpush1.msra.mxu0 0.0
    %170 = vmatprep.subr.mxu0 0.0
    %171 = vmatpush1.msra.mxu0 0.0
    %172 = vmatprep.subr.mxu0 0.0
    %173 = vmatpush1.msra.mxu0 0.0
    %174 = vmatprep.subr.mxu0 0.0
    %175 = vmatpush1.msra.mxu0 0.0
    %176 = vmatprep.subr.mxu0 0.0
    %177 = vmatpush1.msra.mxu0 0.0
    %178 = vmatprep.subr.mxu0 0.0
    %179 = vmatpush1.msra.mxu0 0.0
    %180 = vmatprep.subr.mxu0 0.0
    %181 = vmatpush1.msra.mxu0 0.0
    %182 = vmatprep.subr.mxu0 0.0
    %183 = vmatpush1.msra.mxu0 0.0
    %184 = vmatprep.subr.mxu0 0.0
    %185 = vmatpush1.msra.mxu0 0.0
    %186 = vmatprep.subr.mxu0 0.0
    %187 = vmatpush1.msra.mxu0 0.0
    %188 = vmatprep.subr.mxu0 0.0
    %189 = vmatpush1.msra.mxu0 0.0
    %190 = vmatprep.subr.mxu0 0.0
    %191 = vmatpush1.msra.mxu0 0.0
    %192 = vmatprep.subr.mxu0 0.0
    %193 = vmatpush1.msra.mxu0 0.0
    %194 = vmatprep.subr.mxu0 0.0
    %195 = vmatpush1.msra.mxu0 0.0
    %196 = vmatprep.subr.mxu0 0.0
    %197 = vmatpush1.msra.mxu0 0.0
    %198 = vmatprep.subr.mxu0 0.0
    %199 = vmatpush1.msra.mxu0 0.0
    %200 = vmatprep.subr.mxu0 0.0
    %201 = vmatpush1.msra.mxu0 0.0
    %202 = vmatprep.subr.mxu0 0.0
    %203 = vmatpush1.msra.mxu0 0.0
    %204 = vmatprep.subr.mxu0 0.0
    %205 = vmatpush1.msra.mxu0 0.0
    %206 = vmatprep.subr.mxu0 0.0
    %207 = vmatpush1.msra.mxu0 0.0
    %208 = vmatprep.subr.mxu0 0.0
    %209 = vmatpush1.msra.mxu0 0.0
    %210 = vmatprep.subr.mxu0 0.0
    %211 = vmatpush1.msra.mxu0 0.0
    %212 = vmatprep.subr.mxu0 0.0
    %213 = vmatpush1.msra.mxu0 0.0
    %214 = vmatprep.subr.mxu0 0.0
    %215 = vmatpush1.msra.mxu0 0.0
    %216 = vmatprep.subr.mxu0 0.0
    %217 = vmatpush1.msra.mxu0 0.0
    %218 = vmatprep.mubr.f32.mxu0 0.0
    %219 = vmatmul.mubr.f32.gmra.mrb[0].mxu0 %v152
    %v220 = vpop.f32.mrb[0].mxu0
    %v221 = vadd.f32 %v148, %v220
    %v222 = vpop.f32.mrb[0].mxu0
    %v223 = vadd.f32 %v148, %v222
    %224 = vdwg.mxu0
    %226 = vset.pattern.permute.xlu0 0
    %227 = vperm.xlu0 %226, %v34
    %v228 = vpop.permute.xlu0 %227
    %v231 = vsel %vm150, %v33, 0
    %233 = vmatprep.subr.mxu0 %v144
    %234 = vmatpush1.msra.mxu0 %v143
    %235 = vmatprep.subr.mxu0 0.0
    %236 = vmatpush1.msra.mxu0 0.0
    %237 = vmatprep.subr.mxu0 0.0
    %238 = vmatpush1.msra.mxu0 0.0
    %239 = vmatprep.subr.mxu0 0.0
    %240 = vmatpush1.msra.mxu0 0.0
    %241 = vmatprep.subr.mxu0 0.0
    %242 = vmatpush1.msra.mxu0 0.0
    %243 = vmatprep.subr.mxu0 0.0
    %244 = vmatpush1.msra.mxu0 0.0
    %245 = vmatprep.subr.mxu0 0.0
    %246 = vmatpush1.msra.mxu0 0.0
    %247 = vmatprep.subr.mxu0 0.0
    %248 = vmatpush1.msra.mxu0 0.0
    %249 = vmatprep.subr.mxu0 0.0
    %250 = vmatpush1.msra.mxu0 0.0
    %251 = vmatprep.subr.mxu0 0.0
    %252 = vmatpush1.msra.mxu0 0.0
    %253 = vmatprep.subr.mxu0 0.0
    %254 = vmatpush1.msra.mxu0 0.0
    %255 = vmatprep.subr.mxu0 0.0
    %256 = vmatpush1.msra.mxu0 0.0
    %257 = vmatprep.subr.mxu0 0.0
    %258 = vmatpush1.msra.mxu0 0.0
    %259 = vmatprep.subr.mxu0 0.0
    %260 = vmatpush1.msra.mxu0 0.0
    %261 = vmatprep.subr.mxu0 0.0
    %262 = vmatpush1.msra.mxu0 0.0
    %263 = vmatprep.subr.mxu0 0.0
    %264 = vmatpush1.msra.mxu0 0.0
    %265 = vmatprep.subr.mxu0 0.0
    %266 = vmatpush1.msra.mxu0 0.0
    %267 = vmatprep.subr.mxu0 0.0
    %268 = vmatpush1.msra.mxu0 0.0
    %269 = vmatprep.subr.mxu0 0.0
    %270 = vmatpush1.msra.mxu0 0.0
    %271 = vmatprep.subr.mxu0 0.0
    %272 = vmatpush1.msra.mxu0 0.0
    %273 = vmatprep.subr.mxu0 0.0
    %274 = vmatpush1.msra.mxu0 0.0
    %275 = vmatprep.subr.mxu0 0.0
    %276 = vmatpush1.msra.mxu0 0.0
    %277 = vmatprep.subr.mxu0 0.0
    %278 = vmatpush1.msra.mxu0 0.0
    %279 = vmatprep.subr.mxu0 0.0
    %280 = vmatpush1.msra.mxu0 0.0
    %281 = vmatprep.subr.mxu0 0.0
    %282 = vmatpush1.msra.mxu0 0.0
    %283 = vmatprep.subr.mxu0 0.0
    %284 = vmatpush1.msra.mxu0 0.0
    %285 = vmatprep.subr.mxu0 0.0
    %286 = vmatpush1.msra.mxu0 0.0
    %287 = vmatprep.subr.mxu0 0.0
    %288 = vmatpush1.msra.mxu0 0.0
    %289 = vmatprep.subr.mxu0 0.0
    %290 = vmatpush1.msra.mxu0 0.0
    %291 = vmatprep.subr.mxu0 0.0
    %292 = vmatpush1.msra.mxu0 0.0
    %293 = vmatprep.subr.mxu0 0.0
    %294 = vmatpush1.msra.mxu0 0.0
    %295 = vmatprep.subr.mxu0 0.0
    %296 = vmatpush1.msra.mxu0 0.0
    %297 = vmatprep.mubr.f32.mxu0 0.0
    %298 = vmatmul.mubr.f32.gmra.mrb[0].mxu0 %v231
    %v299 = vpop.f32.mrb[0].mxu0
    %v300 = vadd.f32 %v228, %v299
    %v301 = vpop.f32.mrb[0].mxu0
    %v302 = vadd.f32 %v228, %v301
    %303 = vdwg.mxu0
    %v306 = vcombine.low %v221, %v223
    %v308 = vmul.f32 %v35, %v306
    %v311 = vcombine.low %v300, %v302
    %v313 = vadd.f32 %v308, %v311
    %314 = vst [vmem:[#allocation2] sm:$0xff] %v313
    %s315 = scalar_lea.vmem %s0, 8
    %v316 = vld [vmem:[%s315] sm:$0xff]
    %v318 = vcombine.high %v316, %v316
    %v319 = vsel %vm55, %v316, 0
    %v321 = vsel %vm55, %v318, 0
    %323 = vmatprep.subr.mxu0 %v321
    %324 = vmatpush1.msra.mxu0 %v319
    %325 = vmatprep.subr.mxu0 0.0
    %326 = vmatpush1.msra.mxu0 0.0
    %327 = vmatprep.subr.mxu0 0.0
    %328 = vmatpush1.msra.mxu0 0.0
    %329 = vmatprep.subr.mxu0 0.0
    %330 = vmatpush1.msra.mxu0 0.0
    %331 = vmatprep.subr.mxu0 0.0
    %332 = vmatpush1.msra.mxu0 0.0
    %333 = vmatprep.subr.mxu0 0.0
    %334 = vmatpush1.msra.mxu0 0.0
    %335 = vmatprep.subr.mxu0 0.0
    %336 = vmatpush1.msra.mxu0 0.0
    %337 = vmatprep.subr.mxu0 0.0
    %338 = vmatpush1.msra.mxu0 0.0
    %339 = vmatprep.subr.mxu0 0.0
    %340 = vmatpush1.msra.mxu0 0.0
    %341 = vmatprep.subr.mxu0 0.0
    %342 = vmatpush1.msra.mxu0 0.0
    %343 = vmatprep.subr.mxu0 0.0
    %344 = vmatpush1.msra.mxu0 0.0
    %345 = vmatprep.subr.mxu0 0.0
    %346 = vmatpush1.msra.mxu0 0.0
    %347 = vmatprep.subr.mxu0 0.0
    %348 = vmatpush1.msra.mxu0 0.0
    %349 = vmatprep.subr.mxu0 0.0
    %350 = vmatpush1.msra.mxu0 0.0
    %351 = vmatprep.subr.mxu0 0.0
    %352 = vmatpush1.msra.mxu0 0.0
    %353 = vmatprep.subr.mxu0 0.0
    %354 = vmatpush1.msra.mxu0 0.0
    %355 = vmatprep.subr.mxu0 0.0
    %356 = vmatpush1.msra.mxu0 0.0
    %357 = vmatprep.subr.mxu0 0.0
    %358 = vmatpush1.msra.mxu0 0.0
    %359 = vmatprep.subr.mxu0 0.0
    %360 = vmatpush1.msra.mxu0 0.0
    %361 = vmatprep.subr.mxu0 0.0
    %362 = vmatpush1.msra.mxu0 0.0
    %363 = vmatprep.subr.mxu0 0.0
    %364 = vmatpush1.msra.mxu0 0.0
    %365 = vmatprep.subr.mxu0 0.0
    %366 = vmatpush1.msra.mxu0 0.0
    %367 = vmatprep.subr.mxu0 0.0
    %368 = vmatpush1.msra.mxu0 0.0
    %369 = vmatprep.subr.mxu0 0.0
    %370 = vmatpush1.msra.mxu0 0.0
    %371 = vmatprep.subr.mxu0 0.0
    %372 = vmatpush1.msra.mxu0 0.0
    %373 = vmatprep.subr.mxu0 0.0
    %374 = vmatpush1.msra.mxu0 0.0
    %375 = vmatprep.subr.mxu0 0.0
    %376 = vmatpush1.msra.mxu0 0.0
    %377 = vmatprep.subr.mxu0 0.0
    %378 = vmatpush1.msra.mxu0 0.0
    %379 = vmatprep.subr.mxu0 0.0
    %380 = vmatpush1.msra.mxu0 0.0
    %381 = vmatprep.subr.mxu0 0.0
    %382 = vmatpush1.msra.mxu0 0.0
    %383 = vmatprep.subr.mxu0 0.0
    %384 = vmatpush1.msra.mxu0 0.0
    %385 = vmatprep.subr.mxu0 0.0
    %386 = vmatpush1.msra.mxu0 0.0
    %387 = vmatprep.mubr.f32.mxu0 0.0
    %388 = vmatmul.mubr.f32.gmra.mrb[0].mxu0 %v50
    %v389 = vpop.f32.mrb[0].mxu0
    %v390 = vadd.f32 %v39, %v389
    %v391 = vpop.f32.mrb[0].mxu0
    %v392 = vadd.f32 %v39, %v391
    %393 = vmatprep.mubr.f32.mxu0 0.0
    %394 = vmatmul.mubr.f32.gmra.mrb[0].mxu0 %v53
    %v395 = vpop.f32.mrb[0].mxu0
    %v396 = vadd.f32 %v44, %v395
    %v397 = vpop.f32.mrb[0].mxu0
    %v398 = vadd.f32 %v44, %v397
    %399 = vdwg.mxu0
    %v400 = vmul.f32 %v390, 0.1
    %v401 = vmul.f32 %v392, 0.1
    %v402 = vmul.f32 %v396, 0.1
    %v403 = vmul.f32 %v398, 0.1
    %v404 = vmax.f32 %v390, %v400
    %v405 = vmax.f32 %v392, %v401
    %v406 = vmax.f32 %v396, %v402
    %v407 = vmax.f32 %v398, %v403
    %408 = vmatprep.subr.mxu0 %v405
    %409 = vmatpush1.msra.mxu0 %v404
    %410 = vmatprep.subr.mxu0 0.0
    %411 = vmatpush1.msra.mxu0 0.0
    %412 = vmatprep.subr.mxu0 0.0
    %413 = vmatpush1.msra.mxu0 0.0
    %414 = vmatprep.subr.mxu0 0.0
    %415 = vmatpush1.msra.mxu0 0.0
    %416 = vmatprep.subr.mxu0 0.0
    %417 = vmatpush1.msra.mxu0 0.0
    %418 = vmatprep.subr.mxu0 0.0
    %419 = vmatpush1.msra.mxu0 0.0
    %420 = vmatprep.subr.mxu0 0.0
    %421 = vmatpush1.msra.mxu0 0.0
    %422 = vmatprep.subr.mxu0 0.0
    %423 = vmatpush1.msra.mxu0 0.0
    %424 = vmatprep.subr.mxu0 0.0
    %425 = vmatpush1.msra.mxu0 0.0
    %426 = vmatprep.subr.mxu0 0.0
    %427 = vmatpush1.msra.mxu0 0.0
    %428 = vmatprep.subr.mxu0 0.0
    %429 = vmatpush1.msra.mxu0 0.0
    %430 = vmatprep.subr.mxu0 0.0
    %431 = vmatpush1.msra.mxu0 0.0
    %432 = vmatprep.subr.mxu0 0.0
    %433 = vmatpush1.msra.mxu0 0.0
    %434 = vmatprep.subr.mxu0 0.0
    %435 = vmatpush1.msra.mxu0 0.0
    %436 = vmatprep.subr.mxu0 0.0
    %437 = vmatpush1.msra.mxu0 0.0
    %438 = vmatprep.subr.mxu0 0.0
    %439 = vmatpush1.msra.mxu0 0.0
    %440 = vmatprep.subr.mxu0 0.0
    %441 = vmatpush1.msra.mxu0 0.0
    %442 = vmatprep.subr.mxu0 0.0
    %443 = vmatpush1.msra.mxu0 0.0
    %444 = vmatprep.subr.mxu0 0.0
    %445 = vmatpush1.msra.mxu0 0.0
    %446 = vmatprep.subr.mxu0 0.0
    %447 = vmatpush1.msra.mxu0 0.0
    %448 = vmatprep.subr.mxu0 0.0
    %449 = vmatpush1.msra.mxu0 0.0
    %450 = vmatprep.subr.mxu0 0.0
    %451 = vmatpush1.msra.mxu0 0.0
    %452 = vmatprep.subr.mxu0 0.0
    %453 = vmatpush1.msra.mxu0 0.0
    %454 = vmatprep.subr.mxu0 0.0
    %455 = vmatpush1.msra.mxu0 0.0
    %456 = vmatprep.subr.mxu0 0.0
    %457 = vmatpush1.msra.mxu0 0.0
    %458 = vmatprep.subr.mxu0 0.0
    %459 = vmatpush1.msra.mxu0 0.0
    %460 = vmatprep.subr.mxu0 0.0
    %461 = vmatpush1.msra.mxu0 0.0
    %462 = vmatprep.subr.mxu0 0.0
    %463 = vmatpush1.msra.mxu0 0.0
    %464 = vmatprep.subr.mxu0 0.0
    %465 = vmatpush1.msra.mxu0 0.0
    %466 = vmatprep.subr.mxu0 0.0
    %467 = vmatpush1.msra.mxu0 0.0
    %468 = vmatprep.subr.mxu0 0.0
    %469 = vmatpush1.msra.mxu0 0.0
    %470 = vmatprep.subr.mxu0 0.0
    %471 = vmatpush1.msra.mxu0 0.0
    %472 = vmatprep.mubr.f32.mxu0 0.0
    %473 = vmatmul.mubr.f32.gmra.mrb[0].mxu0 %v152
    %v474 = vpop.f32.mrb[0].mxu0
    %v475 = vadd.f32 %v148, %v474
    %v476 = vpop.f32.mrb[0].mxu0
    %v477 = vadd.f32 %v148, %v476
    %478 = vdwg.mxu0
    %479 = vmatprep.subr.mxu0 %v407
    %480 = vmatpush1.msra.mxu0 %v406
    %481 = vmatprep.subr.mxu0 0.0
    %482 = vmatpush1.msra.mxu0 0.0
    %483 = vmatprep.subr.mxu0 0.0
    %484 = vmatpush1.msra.mxu0 0.0
    %485 = vmatprep.subr.mxu0 0.0
    %486 = vmatpush1.msra.mxu0 0.0
    %487 = vmatprep.subr.mxu0 0.0
    %488 = vmatpush1.msra.mxu0 0.0
    %489 = vmatprep.subr.mxu0 0.0
    %490 = vmatpush1.msra.mxu0 0.0
    %491 = vmatprep.subr.mxu0 0.0
    %492 = vmatpush1.msra.mxu0 0.0
    %493 = vmatprep.subr.mxu0 0.0
    %494 = vmatpush1.msra.mxu0 0.0
    %495 = vmatprep.subr.mxu0 0.0
    %496 = vmatpush1.msra.mxu0 0.0
    %497 = vmatprep.subr.mxu0 0.0
    %498 = vmatpush1.msra.mxu0 0.0
    %499 = vmatprep.subr.mxu0 0.0
    %500 = vmatpush1.msra.mxu0 0.0
    %501 = vmatprep.subr.mxu0 0.0
    %502 = vmatpush1.msra.mxu0 0.0
    %503 = vmatprep.subr.mxu0 0.0
    %504 = vmatpush1.msra.mxu0 0.0
    %505 = vmatprep.subr.mxu0 0.0
    %506 = vmatpush1.msra.mxu0 0.0
    %507 = vmatprep.subr.mxu0 0.0
    %508 = vmatpush1.msra.mxu0 0.0
    %509 = vmatprep.subr.mxu0 0.0
    %510 = vmatpush1.msra.mxu0 0.0
    %511 = vmatprep.subr.mxu0 0.0
    %512 = vmatpush1.msra.mxu0 0.0
    %513 = vmatprep.subr.mxu0 0.0
    %514 = vmatpush1.msra.mxu0 0.0
    %515 = vmatprep.subr.mxu0 0.0
    %516 = vmatpush1.msra.mxu0 0.0
    %517 = vmatprep.subr.mxu0 0.0
    %518 = vmatpush1.msra.mxu0 0.0
    %519 = vmatprep.subr.mxu0 0.0
    %520 = vmatpush1.msra.mxu0 0.0
    %521 = vmatprep.subr.mxu0 0.0
    %522 = vmatpush1.msra.mxu0 0.0
    %523 = vmatprep.subr.mxu0 0.0
    %524 = vmatpush1.msra.mxu0 0.0
    %525 = vmatprep.subr.mxu0 0.0
    %526 = vmatpush1.msra.mxu0 0.0
    %527 = vmatprep.subr.mxu0 0.0
    %528 = vmatpush1.msra.mxu0 0.0
    %529 = vmatprep.subr.mxu0 0.0
    %530 = vmatpush1.msra.mxu0 0.0
    %531 = vmatprep.subr.mxu0 0.0
    %532 = vmatpush1.msra.mxu0 0.0
    %533 = vmatprep.subr.mxu0 0.0
    %534 = vmatpush1.msra.mxu0 0.0
    %535 = vmatprep.subr.mxu0 0.0
    %536 = vmatpush1.msra.mxu0 0.0
    %537 = vmatprep.subr.mxu0 0.0
    %538 = vmatpush1.msra.mxu0 0.0
    %539 = vmatprep.subr.mxu0 0.0
    %540 = vmatpush1.msra.mxu0 0.0
    %541 = vmatprep.subr.mxu0 0.0
    %542 = vmatpush1.msra.mxu0 0.0
    %543 = vmatprep.mubr.f32.mxu0 0.0
    %544 = vmatmul.mubr.f32.gmra.mrb[0].mxu0 %v231
    %v545 = vpop.f32.mrb[0].mxu0
    %v546 = vadd.f32 %v228, %v545
    %v547 = vpop.f32.mrb[0].mxu0
    %v548 = vadd.f32 %v228, %v547
    %549 = vdwg.mxu0
    %v552 = vcombine.low %v475, %v477
    %v554 = vmul.f32 %v316, %v552
    %v557 = vcombine.low %v546, %v548
    %v559 = vadd.f32 %v554, %v557
    %s560 = scalar_lea.vmem [#allocation2], 8
    %561 = vst [vmem:[%s560] sm:$0xff] %v559
    // Predicated region
    $region30: #{tpu_custom_call.1} parent=1 // pred_check
      _
    $region31: #{tpu_custom_call.1} parent=1 // pred_check_branch
      %563 = sbr.rel (0) target = $region33
    $region32: #{tpu_custom_call.1} parent=1 // pred_region
      %s565 = ssub.s32 256, 256
      %566 = vsyncadd [#allocation3], %s565
      %s567 = sshll.u32 [#allocation2], 4
      %s568 = int_to_ptr.vmem [resolvable:$true] %s567
      %573 = dma.vmem_to_hbm [thread:$0]  %s568, 256, %s7, [#allocation3], 128, 128, 8
    $region33: #{tpu_custom_call.1} parent=1 // pred_fallthru
      _
    // Predicated region
    $region34: #{tpu_custom_call.1} parent=1 // pred_check
      _
    $region35: #{tpu_custom_call.1} parent=1 // pred_check_branch
      %575 = sbr.rel (0) target = $region37
    $region36: #{tpu_custom_call.1} parent=1 // pred_region
      %576 = dma.done [#allocation3], 256
    $region37: #{tpu_custom_call.1} parent=1 // pred_fallthru
      _
    %577 = vsyncpa [#allocation3], 1

</llo_original>
